<compile_context>
chip_gen: v7x
topology: tpu7x:2x2x1
jax: 0.10.0
libtpu: 0.0.40
codegen_flags: <defaults>
</compile_context>

<pallas_src>
import functools
import warnings

import jax
import jax.numpy as jnp
from jax.experimental import pallas as pl
from jax.experimental.pallas import tpu as pltpu


# ---------------------------------------------------------------------------
# Kernel
# ---------------------------------------------------------------------------
def _attn_reducer_kernel(logits_ref, bl_ref, br_ref, ap_ref, bp_ref, w_ref):
    """One (tn, .) row tile.  logits: (tn, 2); bl/br/ap/bp: (tn, H); w: (tn, 2)."""
    logits = logits_ref[...]                               # (tn, 2) f32

    # Exact 2-way softmax in sigmoid form:
    #   w0 = e0 / (e0 + e1) = 1 / (1 + exp(l1 - l0)),   w1 = 1 - w0
    # - no cross-lane max/sum reduces (XLU), no approx reciprocal
    # - overflow-safe: exp(+big) -> inf -> w0 -> 0 ; exp(-big) -> 0 -> w0 -> 1
    e = jnp.exp(logits[:, 1:2] - logits[:, 0:1])           # (tn, 1), EUP
    w0 = 1.0 / (1.0 + e)                                   # (tn, 1)
    w1 = 1.0 - w0                                          # (tn, 1)
    w_ref[...] = jnp.concatenate([w0, w1], axis=1)         # single packed store

    # Weighted child combination + residual parent annotation.
    # bp aliases ap's HBM buffer; the ap block is already resident in VMEM
    # before this store so the overwrite is safe.
    bp_ref[...] = ap_ref[...] + bl_ref[...] * w0 + br_ref[...] * w1


# ---------------------------------------------------------------------------
# Tiling helpers (VMEM- and H-aware)
# ---------------------------------------------------------------------------
def _round_up(x, m):
    return ((x + m - 1) // m) * m


def _vmem_capacity_bytes():
    try:
        return int(pltpu.get_tpu_info().vmem_capacity_bytes)
    except Exception:
        return 64 << 20  # v7x per-TensorCore VMEM — smallest in the fleet


def _tile_rows(n, h):
    """Row tile sized from a VMEM byte budget.

    Streamed bytes per row (f32): 4x (tn,H) arrays (bl, br, ap, bp) plus the
    two (tn,2) arrays (logits, weights); double-buffered by the pipeline.
    """
    bytes_per_row = (4 * h + 2 * 2) * 4
    budget = _vmem_capacity_bytes() // 3          # headroom for compiler scratch
    tn = (budget // (2 * bytes_per_row)) // 8 * 8  # 2x = double buffering
    tn = max(8, min(tn, 4096))                    # >=512-ish rows hits roofline
    if n >= 2048:
        # Give the "parallel" grid axis at least 2 steps so both v7x
        # TensorCores stream; negligible cost on single-TC v5e/v6e.
        tn = min(tn, _round_up((n + 1) // 2, 8))
    if tn >= n:
        return n                                  # one block == full array
    return tn


# ---------------------------------------------------------------------------
# Packed fast path
# ---------------------------------------------------------------------------
@functools.partial(jax.jit, donate_argnums=(3,))
def attn_reducer_packed(logits, b_lefts, b_rights, a_parents):
    """Fast path.

    logits: (N, 2) f32 = cat([attn_lefts, attn_rights], 1)
    b_lefts / b_rights / a_parents: (N, H) f32

    Returns (b_parents (N, H), attn_weights (N, 2)).

    NOTE: a_parents is DONATED and aliased to the b_parents output — do not
    reuse the a_parents array after this call.
    """
    N, H = b_lefts.shape
    tn = _tile_rows(N, H)
    grid = (pl.cdiv(N, tn),)          # ragged last block handled by Pallas masking
    row = lambda i: (i, 0)

    bytes_per_row = (4 * H + 2 * 2) * 4
    vmem_need = 2 * tn * bytes_per_row            # double-buffered streams
    vmem_limit = int(min(_vmem_capacity_bytes(),
                         max(vmem_need + (4 << 20), 32 << 20)))

    b_parents, attn_weights = pl.pallas_call(
        _attn_reducer_kernel,
        out_shape=(
            jax.ShapeDtypeStruct((N, H), jnp.float32),   # b_parents
            jax.ShapeDtypeStruct((N, 2), jnp.float32),   # attn_weights
        ),
        grid=grid,
        in_specs=[
            pl.BlockSpec((tn, 2), row),   # packed attention logits
            pl.BlockSpec((tn, H), row),   # b_lefts
            pl.BlockSpec((tn, H), row),   # b_rights
            pl.BlockSpec((tn, H), row),   # a_parents (aliased -> b_parents)
        ],
        out_specs=(
            pl.BlockSpec((tn, H), row),
            pl.BlockSpec((tn, 2), row),
        ),
        input_output_aliases={3: 0},      # b_parents reuses the a_parents buffer
        compiler_params=pltpu.CompilerParams(
            dimension_semantics=("parallel",),
            vmem_limit_bytes=vmem_limit),
    )(logits, b_lefts, b_rights, a_parents)

    return b_parents, attn_weights


# ---------------------------------------------------------------------------
# Compatibility shim matching the original list-of-(1, .) module interface
# ---------------------------------------------------------------------------
def attn_reducer(attn_lefts, attn_rights, b_lefts, b_rights, a_parents, flag=True):
    """Original interface (lists of (1, .) tensors).  Prefer attn_reducer_packed
    with pre-packed (N, .) arrays on the hot path — the O(N) concatenate/split
    glue here dominates wall clock at tree-model sizes."""
    al = jnp.concatenate(attn_lefts, axis=0).astype(jnp.float32)   # (N, 1)
    ar = jnp.concatenate(attn_rights, axis=0).astype(jnp.float32)  # (N, 1)
    bl = jnp.concatenate(b_lefts, axis=0).astype(jnp.float32)      # (N, H)
    br = jnp.concatenate(b_rights, axis=0).astype(jnp.float32)     # (N, H)
    ap = jnp.concatenate(a_parents, axis=0).astype(jnp.float32)    # (N, H)
    logits = jnp.concatenate([al, ar], axis=1)                     # (N, 2)

    bp, w = attn_reducer_packed(logits, bl, br, ap)   # ap (freshly built) is donated

    # batch_unbundle == split into N tensors of shape (1, H)
    b_parents_list = tuple(jnp.split(bp, bp.shape[0], axis=0))
    return b_parents_list, (w, al, ar, bl, br)


# ---------------------------------------------------------------------------
# Pure-JAX reference
# ---------------------------------------------------------------------------
def _reference(logits, bl, br, ap):
    w = jax.nn.softmax(logits, axis=1)
    return bl * w[:, 0:1] + br * w[:, 1:2] + ap, w


if __name__ == "__main__":
    # Keep stderr clean if the donation hint cannot be honoured on some backend.
    warnings.filterwarnings("ignore", message="Some donated buffers were not usable")
    warnings.filterwarnings("ignore", message=".*[Dd]onation is not implemented.*")

    key = jax.random.PRNGKey(0)
    N, H = 8, 32   # 8 tree nodes, hidden size 32
    k1, k2, k3, k4, k5 = jax.random.split(key, 5)

    al = jax.random.normal(k1, (N, 1), jnp.float32)
    ar = jax.random.normal(k2, (N, 1), jnp.float32)
    bl = jax.random.normal(k3, (N, H), jnp.float32)
    br = jax.random.normal(k4, (N, H), jnp.float32)
    ap = jax.random.normal(k5, (N, H), jnp.float32)

    logits = jnp.concatenate([al, ar], axis=1)                     # (N, 2)

    # Per-node lists for the compatibility-shim check — built BEFORE the packed
    # call because attn_reducer_packed donates (clobbers) its a_parents arg.
    al_list = [al[i:i + 1] for i in range(N)]
    ar_list = [ar[i:i + 1] for i in range(N)]
    bl_list = [bl[i:i + 1] for i in range(N)]
    br_list = [br[i:i + 1] for i in range(N)]
    ap_list = [ap[i:i + 1] for i in range(N)]

    # Pure-JAX reference, fully settled before ap is donated.
    bp_expect, w_expect = _reference(logits, bl, br, ap)
    bp_expect, w_expect = jax.block_until_ready((bp_expect, w_expect))

    # --- packed fast path (donates ap) ---
    bp, w = attn_reducer_packed(logits, bl, br, ap)
    jax.block_until_ready((bp, w))
    assert bp.shape == (N, H) and w.shape == (N, 2)
    assert jnp.allclose(bp, bp_expect, atol=1e-5, rtol=1e-5), "b_parents mismatch"
    assert jnp.allclose(w, w_expect, atol=1e-5, rtol=1e-5), "attn_weights mismatch"

    # --- original list-of-(1, .) interface (semantic compatibility) ---
    b_parents_list, (w2, _al, _ar, _bl, _br) = attn_reducer(
        al_list, ar_list, bl_list, br_list, ap_list)
    bp2 = jnp.concatenate(b_parents_list, axis=0)
    jax.block_until_ready((bp2, w2))
    assert len(b_parents_list) == N and b_parents_list[0].shape == (1, H)
    assert jnp.allclose(bp2, bp_expect, atol=1e-5, rtol=1e-5)
    assert jnp.allclose(w2, w_expect, atol=1e-5, rtol=1e-5)

    print("KERNEL_OK")
</pallas_src>

<mosaic_0001>
module attributes {stable_mosaic.version = 11 : i64} {
  func.func @_attn_reducer_kernel(%arg0: i32, %arg1: memref<8x2xf32, #tpu.memory_space<vmem>>, %arg2: memref<8x32xf32, #tpu.memory_space<vmem>>, %arg3: memref<8x32xf32, #tpu.memory_space<vmem>>, %arg4: memref<8x32xf32, #tpu.memory_space<vmem>>, %arg5: memref<8x32xf32, #tpu.memory_space<vmem>>, %arg6: memref<8x2xf32, #tpu.memory_space<vmem>>) attributes {dimension_semantics = [#tpu.dimension_semantics<parallel>], iteration_bounds = array<i64: 1>, scalar_prefetch = 0 : i64, scratch_operands = 0 : i64, tpu.core_type = #tpu.core_type<tc>, window_params = [{transform_indices = @transform_0, window_bounds = array<i64: 8, 2>}, {transform_indices = @transform_1, window_bounds = array<i64: 8, 32>}, {transform_indices = @transform_2, window_bounds = array<i64: 8, 32>}, {transform_indices = @transform_3, window_bounds = array<i64: 8, 32>}, {transform_indices = @transform_4, window_bounds = array<i64: 8, 32>}, {transform_indices = @transform_5, window_bounds = array<i64: 8, 2>}]} {
    %c0 = arith.constant 0 : index
    %c0_0 = arith.constant 0 : index
    %0 = vector.load %arg1[%c0, %c0_0] : memref<8x2xf32, #tpu.memory_space<vmem>>, vector<8x2xf32>
    %1 = vector.extract_strided_slice %0 {offsets = [0, 1], sizes = [8, 1], strides = [1, 1]} : vector<8x2xf32> to vector<8x1xf32>
    %2 = vector.extract_strided_slice %0 {offsets = [0, 0], sizes = [8, 1], strides = [1, 1]} : vector<8x2xf32> to vector<8x1xf32>
    %3 = arith.subf %1, %2 : vector<8x1xf32>
    %4 = math.exp %3 : vector<8x1xf32>
    %cst = arith.constant 1.000000e+00 : f32
    %5 = vector.broadcast %cst : f32 to vector<8x1xf32>
    %6 = arith.addf %5, %4 : vector<8x1xf32>
    %cst_1 = arith.constant 1.000000e+00 : f32
    %7 = vector.broadcast %cst_1 : f32 to vector<8x1xf32>
    %8 = arith.divf %7, %6 : vector<8x1xf32>
    %cst_2 = arith.constant 1.000000e+00 : f32
    %9 = vector.broadcast %cst_2 : f32 to vector<8x1xf32>
    %10 = arith.subf %9, %8 : vector<8x1xf32>
    %11 = tpu.concatenate %8, %10 in 1 : vector<8x1xf32>, vector<8x1xf32> -> vector<8x2xf32>
    %c0_3 = arith.constant 0 : index
    %c0_4 = arith.constant 0 : index
    %12 = vector.load %arg6[%c0_3, %c0_4] : memref<8x2xf32, #tpu.memory_space<vmem>>, vector<8x2xf32>
    tpu.vector_store %arg6[%c0_3, %c0_4], %11 {strides = array<i32>} : memref<8x2xf32, #tpu.memory_space<vmem>>, vector<8x2xf32>,
    %c0_5 = arith.constant 0 : index
    %c0_6 = arith.constant 0 : index
    %13 = vector.load %arg4[%c0_5, %c0_6] : memref<8x32xf32, #tpu.memory_space<vmem>>, vector<8x32xf32>
    %c0_7 = arith.constant 0 : index
    %c0_8 = arith.constant 0 : index
    %14 = vector.load %arg2[%c0_7, %c0_8] : memref<8x32xf32, #tpu.memory_space<vmem>>, vector<8x32xf32>
    %15 = vector.broadcast %8 : vector<8x1xf32> to vector<8x32xf32>
    %16 = arith.mulf %14, %15 : vector<8x32xf32>
    %17 = arith.addf %13, %16 : vector<8x32xf32>
    %c0_9 = arith.constant 0 : index
    %c0_10 = arith.constant 0 : index
    %18 = vector.load %arg3[%c0_9, %c0_10] : memref<8x32xf32, #tpu.memory_space<vmem>>, vector<8x32xf32>
    %19 = vector.broadcast %10 : vector<8x1xf32> to vector<8x32xf32>
    %20 = arith.mulf %18, %19 : vector<8x32xf32>
    %21 = arith.addf %17, %20 : vector<8x32xf32>
    %c0_11 = arith.constant 0 : index
    %c0_12 = arith.constant 0 : index
    %22 = vector.load %arg5[%c0_11, %c0_12] : memref<8x32xf32, #tpu.memory_space<vmem>>, vector<8x32xf32>
    tpu.vector_store %arg5[%c0_11, %c0_12], %21 {strides = array<i32>} : memref<8x32xf32, #tpu.memory_space<vmem>>, vector<8x32xf32>,
    return
  }
  func.func @transform_0(%arg0: i32) -> (i32, i32) {
    %c0_i32 = arith.constant 0 : i32
    %c0_i32_0 = arith.constant 0 : i32
    return %arg0, %c0_i32 : i32, i32
  }
  func.func @transform_1(%arg0: i32) -> (i32, i32) {
    %c0_i32 = arith.constant 0 : i32
    %c0_i32_0 = arith.constant 0 : i32
    return %arg0, %c0_i32 : i32, i32
  }
  func.func @transform_2(%arg0: i32) -> (i32, i32) {
    %c0_i32 = arith.constant 0 : i32
    %c0_i32_0 = arith.constant 0 : i32
    return %arg0, %c0_i32 : i32, i32
  }
  func.func @transform_3(%arg0: i32) -> (i32, i32) {
    %c0_i32 = arith.constant 0 : i32
    %c0_i32_0 = arith.constant 0 : i32
    return %arg0, %c0_i32 : i32, i32
  }
  func.func @transform_4(%arg0: i32) -> (i32, i32) {
    %c0_i32 = arith.constant 0 : i32
    %c0_i32_0 = arith.constant 0 : i32
    return %arg0, %c0_i32 : i32, i32
  }
  func.func @transform_5(%arg0: i32) -> (i32, i32) {
    %c0_i32 = arith.constant 0 : i32
    %c0_i32_0 = arith.constant 0 : i32
    return %arg0, %c0_i32 : i32, i32
  }
}

</mosaic_0001>

<llo_original>
// kernel: attn_reducer_packed.1
$region0: #{attn_reducer_packed.1}
  #allocation0 [shape = 'u32[]', space=smem, size = 0x4, offset = 0x4, fixed_abs, tag = 'smem constant byte address 0x4 - core index']
  #allocation1 [shape = 'u32[144,128]{1,0:T(1,128)}', space=vmem, size = 0x12000, scoped, tag = 'internal scratch']
  %s0 = inlined_call_operand.vmem [shape: f32[8,2], index: 0, kind: input, shape index: {}]
  %s1 = inlined_call_operand.vmem [shape: f32[8,32], index: 1, kind: input, shape index: {}]
  %s2 = inlined_call_operand.vmem [shape: f32[8,32], index: 2, kind: input, shape index: {}]
  %s3 = inlined_call_operand.hbm [shape: f32[8,32], index: 3, kind: input, shape index: {}, may-alias: {3,4}]
  %s4 = inlined_call_operand.hbm [shape: f32[8,32], index: 4, kind: output, shape index: {0}, may-alias: {3,4}]
  %s5 = inlined_call_operand.vmem [shape: f32[8,2], index: 5, kind: output, shape index: {1}]
  %6 = xla_tuple %s4, %s5
  %s7 = sld [smem:[#allocation0]]
  $region38: #{attn_reducer_packed.1} parent=0
    _
  %s9 = ssub.s32 1, %s7
  %s10 = scalar_select 0, %s9, %s7
  $region1: #{attn_reducer_packed.1} parent=0
    #allocation2 [shape = 'u8[4096]{0}', space=vmem, size = 0x1000, scoped, tag = 'input window, operand 3, single buffered']
    #allocation3 [shape = 's32[1]{0}', space=sflag, size = 0x4, scoped, tag = 'scoped memory for attn_reducer_packed.1']
    #allocation4 [shape = 's32[1]{0}', space=sflag, size = 0x4, scoped, tag = 'scoped memory for attn_reducer_packed.1']
    #allocation5 [shape = 'u8[4096]{0}', space=vmem, size = 0x1000, scoped, tag = 'output window, operand 0, single buffered']
    %11 = vsyncpa [#allocation3], 0
    %12 = vsyncpa [#allocation4], 0
    // Predicated region
    $region2: #{attn_reducer_packed.1} parent=1 // pred_check
      _
    $region3: #{attn_reducer_packed.1} parent=1 // pred_check_branch
      %14 = sbr.rel (0) target = $region5
    $region4: #{attn_reducer_packed.1} parent=1 // pred_region
      _
    $region5: #{attn_reducer_packed.1} parent=1 // pred_fallthru
      _
    // Predicated region
    $region6: #{attn_reducer_packed.1} parent=1 // pred_check
      _
    $region7: #{attn_reducer_packed.1} parent=1 // pred_check_branch
      %16 = sbr.rel (0) target = $region9
    $region8: #{attn_reducer_packed.1} parent=1 // pred_region
      _
    $region9: #{attn_reducer_packed.1} parent=1 // pred_fallthru
      _
    // Predicated region
    $region10: #{attn_reducer_packed.1} parent=1 // pred_check
      _
    $region11: #{attn_reducer_packed.1} parent=1 // pred_check_branch
      %18 = sbr.rel (0) target = $region13
    $region12: #{attn_reducer_packed.1} parent=1 // pred_region
      _
    $region13: #{attn_reducer_packed.1} parent=1 // pred_fallthru
      _
    // Predicated region
    $region14: #{attn_reducer_packed.1} parent=1 // pred_check
      _
    $region15: #{attn_reducer_packed.1} parent=1 // pred_check_branch
      %20 = sbr.rel (0) target = $region17
    $region16: #{attn_reducer_packed.1} parent=1 // pred_region
      %s22 = ssub.s32 128, 128
      %23 = vsyncadd [#allocation3], %s22
      %s25 = sshll.u32 [#allocation2], 4
      %s26 = int_to_ptr.vmem [resolvable:$true] %s25
      %28 = dma.hbm_to_vmem [thread:$0]  %s3, 128, %s26, [#allocation3]
    $region17: #{attn_reducer_packed.1} parent=1 // pred_fallthru
      _
    // Predicated region
    $region18: #{attn_reducer_packed.1} parent=1 // pred_check
      _
    $region19: #{attn_reducer_packed.1} parent=1 // pred_check_branch
      %30 = sbr.rel (0) target = $region21
    $region20: #{attn_reducer_packed.1} parent=1 // pred_region
      %31 = dma.done [#allocation3], 128
    $region21: #{attn_reducer_packed.1} parent=1 // pred_fallthru
      _
    %v32 = vld [vmem:[%s0] sm:$0xff]
    %34 = vrot.lane.b32.xlu0 %v32, 1
    %v35 = vpop.permute.xlu0 %34
    %v37 = vsub.f32 %v32, %v35
    %v38 = vmul.f32 %v37, 1.442695
    %v39 = vpow.pop %v38
    %v40 = vadd.f32 %v39, 1.0
    %v41 = vrcp.pop %v40
    %v42 = vmul.f32 1.0, %v41
    %v43 = vsub.f32 1.0, %v42
    %45 = vrot.lane.b32.xlu0 %v42, 127
    %v46 = vpop.permute.xlu0 %45
    %vm48 = vcmask 7168
    %v49 = vsel %vm48, %v46, %v43
    %vm50 = vcmask 15360
    %51 = vst.msk [vmem:[%s5] sm:$0xff] %vm50, %v49
    %v52 = vld [vmem:[#allocation2] sm:$0xff]
    %v53 = vld [vmem:[%s1] sm:$0xff]
    %54 = vset.pattern.permute.xlu0 1
    %55 = vperm.xlu0 %54, %v42
    %v56 = vpop.permute.xlu0 %55
    %v58 = vmul.f32 %v53, %v56
    %v59 = vadd.f32 %v52, %v58
    %v60 = vld [vmem:[%s2] sm:$0xff]
    %62 = vset.pattern.permute.xlu0 1
    %63 = vperm.xlu0 %62, %v43
    %v64 = vpop.permute.xlu0 %63
    %v66 = vmul.f32 %v60, %v64
    %v67 = vadd.f32 %v59, %v66
    %vm68 = vcmask 261120
    %69 = vst.msk [vmem:[#allocation5] sm:$0xff] %vm68, %v67
    // Predicated region
    $region22: #{attn_reducer_packed.1} parent=1 // pred_check
      _
    $region23: #{attn_reducer_packed.1} parent=1 // pred_check_branch
      %71 = sbr.rel (0) target = $region25
    $region24: #{attn_reducer_packed.1} parent=1 // pred_region
      %s73 = ssub.s32 128, 128
      %74 = vsyncadd [#allocation4], %s73
      %s76 = sshll.u32 [#allocation5], 4
      %s77 = int_to_ptr.vmem [resolvable:$true] %s76
      %79 = dma.vmem_to_hbm [thread:$0]  %s77, 128, %s4, [#allocation4]
    $region25: #{attn_reducer_packed.1} parent=1 // pred_fallthru
      _
    // Predicated region
    $region26: #{attn_reducer_packed.1} parent=1 // pred_check
      _
    $region27: #{attn_reducer_packed.1} parent=1 // pred_check_branch
      %81 = sbr.rel (0) target = $region29
    $region28: #{attn_reducer_packed.1} parent=1 // pred_region
      _
    $region29: #{attn_reducer_packed.1} parent=1 // pred_fallthru
      _
    // Predicated region
    $region30: #{attn_reducer_packed.1} parent=1 // pred_check
      _
    $region31: #{attn_reducer_packed.1} parent=1 // pred_check_branch
      %83 = sbr.rel (0) target = $region33
    $region32: #{attn_reducer_packed.1} parent=1 // pred_region
      %84 = dma.done [#allocation4], 128
    $region33: #{attn_reducer_packed.1} parent=1 // pred_fallthru
      _
    // Predicated region
    $region34: #{attn_reducer_packed.1} parent=1 // pred_check
      _
    $region35: #{attn_reducer_packed.1} parent=1 // pred_check_branch
      %86 = sbr.rel (0) target = $region37
    $region36: #{attn_reducer_packed.1} parent=1 // pred_region
      _
    $region37: #{attn_reducer_packed.1} parent=1 // pred_fallthru
      _
    %87 = vsyncpa [#allocation3], 1
    %88 = vsyncpa [#allocation4], 1

</llo_original>
